<compile_context>
chip_gen: v5e
topology: v5e:2x2
jax: 0.10.0
libtpu: 0.0.40
codegen_flags: <defaults>
</compile_context>

<pallas_src>
import functools

import jax
import jax.numpy as jnp
from jax.experimental import pallas as pl
from jax.experimental.pallas import tpu as pltpu

HIDDEN = 128
BN_EPS = 1e-5


def _round_up(n, m):
    return (n + m - 1) // m * m


# --------------------------------------------------------------------------
# Kernel 1: h = x @ W1 + b1 (per batch tile) + per-feature sum / sum-of-squares
# accumulated across batch tiles (reduction axis -> "arbitrary" semantics).
# --------------------------------------------------------------------------
def _linear1_stats_kernel(x_ref, w1_ref, b1_ref, h_ref, sum_ref, sq_ref, *,
                          batch, block_b):
    i = pl.program_id(0)

    @pl.when(i == 0)
    def _():
        sum_ref[...] = jnp.zeros_like(sum_ref)
        sq_ref[...] = jnp.zeros_like(sq_ref)

    # MXU matmul (operands may be bf16); accumulate in f32.
    h = jnp.dot(x_ref[...], w1_ref[...],
                preferred_element_type=jnp.float32) + b1_ref[...]

    # Mask batch-padding rows so BN statistics only see the true batch.
    row = i * block_b + jax.lax.broadcasted_iota(jnp.int32, (block_b, 1), 0)
    valid = row < batch
    h_valid = jnp.where(valid, h, 0.0)
    sum_ref[...] += jnp.sum(h_valid, axis=0, keepdims=True)
    sq_ref[...] += jnp.sum(h_valid * h_valid, axis=0, keepdims=True)

    h_ref[...] = h.astype(h_ref.dtype)


# --------------------------------------------------------------------------
# Kernel 2: y = h @ W2_eff + b2_eff   (BatchNorm affine folded into W2/b2).
# Fully independent tiles -> ("parallel", "parallel") grid.
# --------------------------------------------------------------------------
def _linear2_kernel(h_ref, w2_ref, b2_ref, o_ref):
    y = jnp.dot(h_ref[...], w2_ref[...],
                preferred_element_type=jnp.float32) + b2_ref[...]
    o_ref[...] = y.astype(o_ref.dtype)


def latent_forward(x, w1, b1, gamma, beta, w2, b2, *,
                   compute_dtype=jnp.bfloat16, block_b=256, block_f=512):
    B, F = x.shape
    assert w1.shape == (F, HIDDEN) and w2.shape == (HIDDEN, F)

    # Pad feature dims to multiples of 128 (full MXU tiles, lane-dense stores).
    f_pad = _round_up(F, 128)
    # Batch tile: multiple of 8 sublanes; pad B to a tile multiple and mask the
    # padded rows out of the BN statistics.
    bm = min(block_b, _round_up(B, 8))
    b_pad = _round_up(B, bm)
    n_btiles = b_pad // bm
    fn = min(block_f, f_pad)
    if f_pad % fn:
        fn = 128
    n_ftiles = f_pad // fn

    cbytes = jnp.dtype(compute_dtype).itemsize

    x_p = jnp.pad(x, ((0, b_pad - B), (0, f_pad - F))).astype(compute_dtype)
    w1_p = jnp.pad(w1, ((0, f_pad - F), (0, 0))).astype(compute_dtype)
    b1_p = b1.reshape(1, HIDDEN).astype(jnp.float32)

    cost1 = pl.CostEstimate(
        flops=2 * b_pad * f_pad * HIDDEN,
        transcendentals=0,
        bytes_accessed=(x_p.size + w1_p.size + b_pad * HIDDEN) * cbytes,
    )

    # Tiles here are small (<= a few MiB even for large F), comfortably inside
    # the 32 MiB scoped VMEM default on all of v5e/v6e/v7x, so we do not raise
    # vmem_limit_bytes.
    h, hsum, hsq = pl.pallas_call(
        functools.partial(_linear1_stats_kernel, batch=B, block_b=bm),
        out_shape=(
            jax.ShapeDtypeStruct((b_pad, HIDDEN), compute_dtype),
            jax.ShapeDtypeStruct((1, HIDDEN), jnp.float32),
            jax.ShapeDtypeStruct((1, HIDDEN), jnp.float32),
        ),
        grid_spec=pltpu.PrefetchScalarGridSpec(
            num_scalar_prefetch=0,
            grid=(n_btiles,),
            in_specs=[
                pl.BlockSpec((bm, f_pad), lambda i: (i, 0)),
                pl.BlockSpec((f_pad, HIDDEN), lambda i: (0, 0)),   # resident
                pl.BlockSpec((1, HIDDEN), lambda i: (0, 0)),       # resident
            ],
            out_specs=[
                pl.BlockSpec((bm, HIDDEN), lambda i: (i, 0)),
                pl.BlockSpec((1, HIDDEN), lambda i: (0, 0)),       # accumulator
                pl.BlockSpec((1, HIDDEN), lambda i: (0, 0)),       # accumulator
            ],
        ),
        compiler_params=pltpu.CompilerParams(
            dimension_semantics=("arbitrary",)),
        cost_estimate=cost1,
    )(x_p, w1_p, b1_p)

    # --- Fold BatchNorm (training-mode biased batch stats, eps=1e-5) and
    #     inference-mode Dropout (identity) into Linear-2:
    #       y = h @ (s * W2) + ((beta - mean*s) @ W2 + b2),  s = gamma*rsqrt(var+eps)
    mean = hsum / B
    var = hsq / B - mean * mean                      # biased variance
    s = gamma.reshape(1, HIDDEN).astype(jnp.float32) * jax.lax.rsqrt(var + BN_EPS)
    shift = beta.reshape(1, HIDDEN).astype(jnp.float32) - mean * s

    w2_f32 = w2.astype(jnp.float32)
    w2_eff = s.reshape(HIDDEN, 1) * w2_f32           # (128, F)
    b2_eff = shift @ w2_f32 + b2.reshape(1, F).astype(jnp.float32)

    w2_p = jnp.pad(w2_eff, ((0, 0), (0, f_pad - F))).astype(compute_dtype)
    b2_p = jnp.pad(b2_eff, ((0, 0), (0, f_pad - F)))

    cost2 = pl.CostEstimate(
        flops=2 * b_pad * HIDDEN * f_pad,
        transcendentals=0,
        bytes_accessed=(b_pad * HIDDEN + w2_p.size) * cbytes
        + b_pad * f_pad * x.dtype.itemsize,
    )

    y = pl.pallas_call(
        _linear2_kernel,
        out_shape=jax.ShapeDtypeStruct((b_pad, f_pad), x.dtype),
        grid_spec=pltpu.PrefetchScalarGridSpec(
            num_scalar_prefetch=0,
            grid=(n_btiles, n_ftiles),
            in_specs=[
                pl.BlockSpec((bm, HIDDEN), lambda i, j: (i, 0)),
                pl.BlockSpec((HIDDEN, fn), lambda i, j: (0, j)),
                pl.BlockSpec((1, fn), lambda i, j: (0, j)),
            ],
            out_specs=pl.BlockSpec((bm, fn), lambda i, j: (i, j)),
        ),
        compiler_params=pltpu.CompilerParams(
            dimension_semantics=("parallel", "parallel")),
        cost_estimate=cost2,
    )(h, w2_p, b2_p)

    return y[:B, :F]


def init_params(key, in_features):
    """Deterministic PyTorch-style (uniform +/- 1/sqrt(fan_in)) init."""
    k1, k2, k3, k4 = jax.random.split(key, 4)
    bound1 = 1.0 / jnp.sqrt(in_features)
    w1 = jax.random.uniform(k1, (in_features, HIDDEN), jnp.float32,
                            -bound1, bound1)
    b1 = jax.random.uniform(k2, (1, HIDDEN), jnp.float32, -bound1, bound1)

    gamma = jnp.ones((1, HIDDEN), jnp.float32)
    beta = jnp.zeros((1, HIDDEN), jnp.float32)

    bound2 = 1.0 / jnp.sqrt(HIDDEN)
    w2 = jax.random.uniform(k3, (HIDDEN, in_features), jnp.float32,
                            -bound2, bound2)
    b2 = jax.random.uniform(k4, (1, in_features), jnp.float32,
                            -bound2, bound2)
    return w1, b1, gamma, beta, w2, b2


def reference_forward(x, w1, b1, gamma, beta, w2, b2):
    h = x @ w1 + b1
    mean = h.mean(axis=0, keepdims=True)
    var = ((h - mean) ** 2).mean(axis=0, keepdims=True)
    h = (h - mean) / jnp.sqrt(var + BN_EPS) * gamma + beta
    return h @ w2 + b2


if __name__ == "__main__":
    key = jax.random.PRNGKey(0)
    kx, kp, kx2 = jax.random.split(key, 3)

    in_features = 32
    params = init_params(kp, in_features)

    # --- small shape, f32 compute path: tight correctness check ---
    x = jax.random.normal(kx, (8, in_features), jnp.float32)
    out = jax.block_until_ready(
        latent_forward(x, *params, compute_dtype=jnp.float32))
    ref = reference_forward(x, *params)
    assert out.shape == x.shape
    assert jnp.allclose(out, ref, atol=1e-3, rtol=1e-3), "f32 mismatch (small)"

    # --- multi-tile batch: exercises cross-tile BN accumulation + row masking ---
    x2 = jax.random.normal(kx2, (100, in_features), jnp.float32)
    out2 = jax.block_until_ready(
        latent_forward(x2, *params, compute_dtype=jnp.float32, block_b=64))
    ref2 = reference_forward(x2, *params)
    assert jnp.allclose(out2, ref2, atol=1e-3, rtol=1e-3), "f32 mismatch (tiled)"

    # --- default bf16 MXU path: looser tolerance vs f32 reference ---
    out_bf16 = jax.block_until_ready(latent_forward(x, *params))
    assert out_bf16.shape == x.shape
    assert jnp.allclose(out_bf16, ref, atol=5e-2, rtol=5e-2), "bf16 mismatch"

    print("KERNEL_OK")
</pallas_src>

<mosaic_0001>
module attributes {stable_mosaic.version = 11 : i64} {
  func.func @_linear1_stats_kernel(%arg0: i32, %arg1: memref<8x128xf32, #tpu.memory_space<vmem>>, %arg2: memref<128x128xf32, #tpu.memory_space<vmem>>, %arg3: memref<1x128xf32, #tpu.memory_space<vmem>>, %arg4: memref<8x128xf32, #tpu.memory_space<vmem>>, %arg5: memref<1x128xf32, #tpu.memory_space<vmem>>, %arg6: memref<1x128xf32, #tpu.memory_space<vmem>>) attributes {dimension_semantics = [#tpu.dimension_semantics<arbitrary>], iteration_bounds = array<i64: 1>, scalar_prefetch = 0 : i64, scratch_operands = 0 : i64, tpu.core_type = #tpu.core_type<tc>, window_params = [{transform_indices = @transform_0, window_bounds = array<i64: 8, 128>}, {pipeline_mode = #tpu.pipeline_mode<synchronous>, transform_indices = @transform_1, window_bounds = array<i64: 128, 128>}, {pipeline_mode = #tpu.pipeline_mode<synchronous>, transform_indices = @transform_2, window_bounds = array<i64: 1, 128>}, {transform_indices = @transform_3, window_bounds = array<i64: 8, 128>}, {pipeline_mode = #tpu.pipeline_mode<synchronous>, transform_indices = @transform_4, window_bounds = array<i64: 1, 128>}, {pipeline_mode = #tpu.pipeline_mode<synchronous>, transform_indices = @transform_5, window_bounds = array<i64: 1, 128>}]} {
    %c0_i32 = arith.constant 0 : i32
    %0 = arith.cmpi eq, %arg0, %c0_i32 : i32
    %1 = arith.extui %0 : i1 to i32
    %c0_i32_0 = arith.constant 0 : i32
    %2 = arith.cmpi ne, %1, %c0_i32_0 : i32
    scf.if %2 {
      %cst_20 = arith.constant 0.000000e+00 : f32
      %31 = vector.broadcast %cst_20 : f32 to vector<1x128xf32>
      %c0_21 = arith.constant 0 : index
      %c0_22 = arith.constant 0 : index
      %32 = vector.load %arg5[%c0_21, %c0_22] : memref<1x128xf32, #tpu.memory_space<vmem>>, vector<1x128xf32>
      tpu.vector_store %arg5[%c0_21, %c0_22], %31 {strides = array<i32>} : memref<1x128xf32, #tpu.memory_space<vmem>>, vector<1x128xf32>,
      %cst_23 = arith.constant 0.000000e+00 : f32
      %33 = vector.broadcast %cst_23 : f32 to vector<1x128xf32>
      %c0_24 = arith.constant 0 : index
      %c0_25 = arith.constant 0 : index
      %34 = vector.load %arg6[%c0_24, %c0_25] : memref<1x128xf32, #tpu.memory_space<vmem>>, vector<1x128xf32>
      tpu.vector_store %arg6[%c0_24, %c0_25], %33 {strides = array<i32>} : memref<1x128xf32, #tpu.memory_space<vmem>>, vector<1x128xf32>,
    } else {
    }
    %c0 = arith.constant 0 : index
    %c0_1 = arith.constant 0 : index
    %3 = vector.load %arg1[%c0, %c0_1] : memref<8x128xf32, #tpu.memory_space<vmem>>, vector<8x128xf32>
    %c0_2 = arith.constant 0 : index
    %c0_3 = arith.constant 0 : index
    %4 = vector.load %arg2[%c0_2, %c0_3] : memref<128x128xf32, #tpu.memory_space<vmem>>, vector<128x128xf32>
    %cst = arith.constant dense<0.000000e+00> : vector<8x128xf32>
    %5 = tpu.matmul %3, %4, %cst {dimension_numbers = #tpu.dot_dimension_numbers<[1], [0], [0], [1], [0, 0, 1, 1], [], []>} : vector<8x128xf32>, vector<128x128xf32>, vector<8x128xf32> -> vector<8x128xf32>
    %c0_4 = arith.constant 0 : index
    %c0_5 = arith.constant 0 : index
    %6 = vector.load %arg3[%c0_4, %c0_5] : memref<1x128xf32, #tpu.memory_space<vmem>>, vector<1x128xf32>
    %7 = vector.broadcast %6 : vector<1x128xf32> to vector<8x128xf32>
    %8 = arith.addf %5, %7 : vector<8x128xf32>
    %c8_i32 = arith.constant 8 : i32
    %9 = arith.muli %arg0, %c8_i32 : i32
    %10 = tpu.iota {dimensions = array<i32: 0>} : vector<8x1xi32>
    %11 = vector.broadcast %9 : i32 to vector<8x1xi32>
    %12 = arith.addi %11, %10 : vector<8x1xi32>
    %c8_i32_6 = arith.constant 8 : i32
    %13 = vector.broadcast %c8_i32_6 : i32 to vector<8x1xi32>
    %14 = arith.cmpi slt, %12, %13 : vector<8x1xi32>
    %cst_7 = arith.constant 0.000000e+00 : f32
    %15 = vector.shape_cast %14 : vector<8x1xi1> to vector<8x1xi1>
    %16 = vector.broadcast %15 : vector<8x1xi1> to vector<8x128xi1>
    %17 = vector.broadcast %cst_7 : f32 to vector<8x128xf32>
    %18 = arith.select %16, %8, %17 : vector<8x128xi1>, vector<8x128xf32>
    %c0_8 = arith.constant 0 : index
    %c0_9 = arith.constant 0 : index
    %19 = vector.load %arg5[%c0_8, %c0_9] : memref<1x128xf32, #tpu.memory_space<vmem>>, vector<1x128xf32>
    %cst_10 = arith.constant dense<0.000000e+00> : vector<128xf32>
    %20 = vector.multi_reduction <add>, %18, %cst_10 [0] : vector<8x128xf32> to vector<128xf32>
    %21 = vector.shape_cast %20 : vector<128xf32> to vector<1x128xf32>
    %22 = arith.addf %19, %21 : vector<1x128xf32>
    %c0_11 = arith.constant 0 : index
    %c0_12 = arith.constant 0 : index
    %23 = vector.load %arg5[%c0_11, %c0_12] : memref<1x128xf32, #tpu.memory_space<vmem>>, vector<1x128xf32>
    tpu.vector_store %arg5[%c0_11, %c0_12], %22 {strides = array<i32>} : memref<1x128xf32, #tpu.memory_space<vmem>>, vector<1x128xf32>,
    %c0_13 = arith.constant 0 : index
    %c0_14 = arith.constant 0 : index
    %24 = vector.load %arg6[%c0_13, %c0_14] : memref<1x128xf32, #tpu.memory_space<vmem>>, vector<1x128xf32>
    %25 = arith.mulf %18, %18 : vector<8x128xf32>
    %cst_15 = arith.constant dense<0.000000e+00> : vector<128xf32>
    %26 = vector.multi_reduction <add>, %25, %cst_15 [0] : vector<8x128xf32> to vector<128xf32>
    %27 = vector.shape_cast %26 : vector<128xf32> to vector<1x128xf32>
    %28 = arith.addf %24, %27 : vector<1x128xf32>
    %c0_16 = arith.constant 0 : index
    %c0_17 = arith.constant 0 : index
    %29 = vector.load %arg6[%c0_16, %c0_17] : memref<1x128xf32, #tpu.memory_space<vmem>>, vector<1x128xf32>
    tpu.vector_store %arg6[%c0_16, %c0_17], %28 {strides = array<i32>} : memref<1x128xf32, #tpu.memory_space<vmem>>, vector<1x128xf32>,
    %c0_18 = arith.constant 0 : index
    %c0_19 = arith.constant 0 : index
    %30 = vector.load %arg4[%c0_18, %c0_19] : memref<8x128xf32, #tpu.memory_space<vmem>>, vector<8x128xf32>
    tpu.vector_store %arg4[%c0_18, %c0_19], %8 {strides = array<i32>} : memref<8x128xf32, #tpu.memory_space<vmem>>, vector<8x128xf32>,
    return
  }
  func.func @transform_0(%arg0: i32) -> (i32, i32) {
    %c0_i32 = arith.constant 0 : i32
    %c0_i32_0 = arith.constant 0 : i32
    return %arg0, %c0_i32 : i32, i32
  }
  func.func @transform_1(%arg0: i32) -> (i32, i32) {
    %c0_i32 = arith.constant 0 : i32
    %c0_i32_0 = arith.constant 0 : i32
    %c0_i32_1 = arith.constant 0 : i32
    return %c0_i32, %c0_i32_0 : i32, i32
  }
  func.func @transform_2(%arg0: i32) -> (i32, i32) {
    %c0_i32 = arith.constant 0 : i32
    %c0_i32_0 = arith.constant 0 : i32
    %c0_i32_1 = arith.constant 0 : i32
    return %c0_i32, %c0_i32_0 : i32, i32
  }
  func.func @transform_3(%arg0: i32) -> (i32, i32) {
    %c0_i32 = arith.constant 0 : i32
    %c0_i32_0 = arith.constant 0 : i32
    return %arg0, %c0_i32 : i32, i32
  }
  func.func @transform_4(%arg0: i32) -> (i32, i32) {
    %c0_i32 = arith.constant 0 : i32
    %c0_i32_0 = arith.constant 0 : i32
    %c0_i32_1 = arith.constant 0 : i32
    return %c0_i32, %c0_i32_0 : i32, i32
  }
  func.func @transform_5(%arg0: i32) -> (i32, i32) {
    %c0_i32 = arith.constant 0 : i32
    %c0_i32_0 = arith.constant 0 : i32
    %c0_i32_1 = arith.constant 0 : i32
    return %c0_i32, %c0_i32_0 : i32, i32
  }
}

</mosaic_0001>

<llo_original>
// kernel: tpu_custom_call.1
$region0: #{tpu_custom_call.1}
  #allocation0 [shape = 'u32[]', space=smem, size = 0x4, offset = 0x4, fixed_abs, tag = 'smem constant byte address 0x4 - core index']
  #allocation1 [shape = 'u32[72,128]{1,0:T(1,128)}', space=vmem, size = 0x9000, scoped, tag = 'internal scratch']
  %s0 = inlined_call_operand.hbm [shape: f32[8,128], index: 0, kind: input, shape index: {}]
  %s1 = inlined_call_operand.hbm [shape: f32[128,128], index: 1, kind: input, shape index: {}]
  %s2 = inlined_call_operand.vmem [shape: f32[1,128], index: 2, kind: input, shape index: {}]
  %s3 = inlined_call_operand.hbm [shape: f32[8,128], index: 3, kind: output, shape index: {0}]
  %s4 = inlined_call_operand.hbm [shape: f32[1,128], index: 4, kind: output, shape index: {1}]
  %s5 = inlined_call_operand.hbm [shape: f32[1,128], index: 5, kind: output, shape index: {2}]
  %6 = xla_tuple %s3, %s4, %s5
  %s7 = sld [smem:[#allocation0]]
  $region50: #{tpu_custom_call.1} parent=0
    _
  %s9 = ssub.s32 1, %s7
  %s10 = scalar_select 0, %s9, %s7
  $region1: #{tpu_custom_call.1} parent=0
    #allocation2 [shape = 'u8[4096]{0}', space=vmem, size = 0x1000, scoped, tag = 'input window, operand 0, single buffered']
    #allocation3 [shape = 's32[1]{0}', space=sflag, size = 0x4, scoped, tag = 'scoped memory for tpu_custom_call.1']
    #allocation4 [shape = 's32[1]{0}', space=sflag, size = 0x4, scoped, tag = 'scoped memory for tpu_custom_call.1']
    #allocation5 [shape = 'u8[65536]{0}', space=vmem, size = 0x10000, scoped, tag = 'input window, operand 1, single buffered']
    #allocation6 [shape = 's32[1]{0}', space=sflag, size = 0x4, scoped, tag = 'scoped memory for tpu_custom_call.1']
    #allocation7 [shape = 'u8[4096]{0}', space=vmem, size = 0x1000, scoped, tag = 'output window, operand 0, single buffered']
    #allocation8 [shape = 'u8[512]{0}', space=vmem, size = 0x400, scoped, tag = 'output window, operand 1, single buffered']
    #allocation9 [shape = 's32[1]{0}', space=sflag, size = 0x4, scoped, tag = 'scoped memory for tpu_custom_call.1']
    #allocation10 [shape = 'u8[512]{0}', space=vmem, size = 0x400, scoped, tag = 'output window, operand 2, single buffered']
    %11 = vsyncpa [#allocation3], 0
    %12 = vsyncpa [#allocation6], 0
    %13 = vsyncpa [#allocation4], 0
    %14 = vsyncpa [#allocation9], 0
    // Predicated region
    $region2: #{tpu_custom_call.1} parent=1 // pred_check
      _
    $region3: #{tpu_custom_call.1} parent=1 // pred_check_branch
      %16 = sbr.rel (0) target = $region5
    $region4: #{tpu_custom_call.1} parent=1 // pred_region
      %18 = vsyncadd [#allocation3], 0
      %s20 = sshll.u32 %s0, 4
      %s21 = int_to_ptr.hbm [resolvable:$true] %s20
      %s22 = sshll.u32 [#allocation2], 4
      %s23 = int_to_ptr.vmem [resolvable:$true] %s22
      %25 = dma.hbm_to_vmem [thread:$0]  %s21, 128, %s23, [#allocation3]
    $region5: #{tpu_custom_call.1} parent=1 // pred_fallthru
      _
    // Predicated region
    $region6: #{tpu_custom_call.1} parent=1 // pred_check
      _
    $region7: #{tpu_custom_call.1} parent=1 // pred_check_branch
      %27 = sbr.rel (0) target = $region9
    $region8: #{tpu_custom_call.1} parent=1 // pred_region
      %29 = vsyncadd [#allocation6], 0
      %s30 = sshll.u32 %s1, 4
      %s31 = int_to_ptr.hbm [resolvable:$true] %s30
      %s32 = sshll.u32 [#allocation5], 4
      %s33 = int_to_ptr.vmem [resolvable:$true] %s32
      %38 = dma.hbm_to_vmem [thread:$0]  %s31, 2048, %s33, [#allocation6], 128, 128, 8
    $region9: #{tpu_custom_call.1} parent=1 // pred_fallthru
      _
    // Predicated region
    $region10: #{tpu_custom_call.1} parent=1 // pred_check
      _
    $region11: #{tpu_custom_call.1} parent=1 // pred_check_branch
      %40 = sbr.rel (0) target = $region13
    $region12: #{tpu_custom_call.1} parent=1 // pred_region
      _
    $region13: #{tpu_custom_call.1} parent=1 // pred_fallthru
      _
    // Predicated region
    $region14: #{tpu_custom_call.1} parent=1 // pred_check
      _
    $region15: #{tpu_custom_call.1} parent=1 // pred_check_branch
      %42 = sbr.rel (0) target = $region17
    $region16: #{tpu_custom_call.1} parent=1 // pred_region
      %44 = dma.done [#allocation3], 128
    $region17: #{tpu_custom_call.1} parent=1 // pred_fallthru
      _
    // Predicated region
    $region18: #{tpu_custom_call.1} parent=1 // pred_check
      _
    $region19: #{tpu_custom_call.1} parent=1 // pred_check_branch
      %46 = sbr.rel (0) target = $region21
    $region20: #{tpu_custom_call.1} parent=1 // pred_region
      %48 = dma.done [#allocation6], 2048
    $region21: #{tpu_custom_call.1} parent=1 // pred_fallthru
      _
    %p49 = scmp.eq.s32.totalorder 0, 0
    // Predicated region
    $region22: #{tpu_custom_call.1} parent=1 // pred_check
      %p50 = pneg %p49
    $region23: #{tpu_custom_call.1} parent=1 // pred_check_branch
      %52 = sbr.rel (%p50) target = $region25
    $region24: #{tpu_custom_call.1} parent=1 // pred_region
      %53 = vst [vmem:[#allocation8] sm:$0x1] 0.0
      %54 = vst [vmem:[#allocation10] sm:$0x1] 0.0
    $region25: #{tpu_custom_call.1} parent=1 // pred_fallthru
      _
    %v55 = vld [vmem:[#allocation2] sm:$0xff]
    %v56 = vld [vmem:[#allocation5] sm:$0xff]
    %v57 = vld [vmem:[#allocation5 + $0x8] sm:$0xff]
    %v58 = vld [vmem:[#allocation5 + $0x10] sm:$0xff]
    %v59 = vld [vmem:[#allocation5 + $0x18] sm:$0xff]
    %v60 = vld [vmem:[#allocation5 + $0x20] sm:$0xff]
    %v61 = vld [vmem:[#allocation5 + $0x28] sm:$0xff]
    %v62 = vld [vmem:[#allocation5 + $0x30] sm:$0xff]
    %v63 = vld [vmem:[#allocation5 + $0x38] sm:$0xff]
    %v64 = vld [vmem:[#allocation5 + $0x40] sm:$0xff]
    %v65 = vld [vmem:[#allocation5 + $0x48] sm:$0xff]
    %v66 = vld [vmem:[#allocation5 + $0x50] sm:$0xff]
    %v67 = vld [vmem:[#allocation5 + $0x58] sm:$0xff]
    %v68 = vld [vmem:[#allocation5 + $0x60] sm:$0xff]
    %v69 = vld [vmem:[#allocation5 + $0x68] sm:$0xff]
    %v70 = vld [vmem:[#allocation5 + $0x70] sm:$0xff]
    %v71 = vld [vmem:[#allocation5 + $0x78] sm:$0xff]
    %v72 = vld [vmem:[%s2] sm:$0x1]
    %v74 = vperm.slane %v72, 0
    %76 = vmatpush.msra.mxu0 %v71
    %77 = vmatpush.msra.mxu0 %v70
    %78 = vmatpush.msra.mxu0 %v69
    %79 = vmatpush.msra.mxu0 %v68
    %80 = vmatpush.msra.mxu0 %v67
    %81 = vmatpush.msra.mxu0 %v66
    %82 = vmatpush.msra.mxu0 %v65
    %83 = vmatpush.msra.mxu0 %v64
    %84 = vmatpush.msra.mxu0 %v63
    %85 = vmatpush.msra.mxu0 %v62
    %86 = vmatpush.msra.mxu0 %v61
    %87 = vmatpush.msra.mxu0 %v60
    %88 = vmatpush.msra.mxu0 %v59
    %89 = vmatpush.msra.mxu0 %v58
    %90 = vmatpush.msra.mxu0 %v57
    %91 = vmatpush.msra.mxu0 %v56
    %92 = vmatmul.f32.gmra.mxu0 %v55
    %v93 = vpop.f32.mrf.mxu0
    %v94 = vadd.f32 %v74, %v93
    %95 = vdwg.mxu0
    %s96 = smul.u32 0, 8
    %v97 = vlaneseq
    %v98 = vshrl.u32 %v97, 7
    %v99 = vstv %s96
    %v100 = vadd.s32 %v99, %v98
    %vm101 = vcmp.lt.s32.totalorder %v100, 8
    %v102 = vsel %vm101, 1, 0
    %vm103 = vcmp.eq.s32.totalorder %v102, 1
    %v104 = vsel %vm103, %v94, 0.0
    %v105 = vld [vmem:[#allocation8] sm:$0x1]
    %v106 = vrot.slane %v104, 4
    %v107 = vadd.f32 %v104, %v106
    %v108 = vrot.slane %v107, 2
    %v109 = vadd.f32 %v107, %v108
    %v110 = vrot.slane %v109, 1
    %v111 = vadd.f32 %v109, %v110
    %v112 = vadd.f32 %v105, %v111
    %113 = vst [vmem:[#allocation8] sm:$0x1] %v112
    %v114 = vld [vmem:[#allocation10] sm:$0x1]
    %v115 = vmul.f32 %v104, %v104
    %v116 = vrot.slane %v115, 4
    %v117 = vadd.f32 %v115, %v116
    %v118 = vrot.slane %v117, 2
    %v119 = vadd.f32 %v117, %v118
    %v120 = vrot.slane %v119, 1
    %v121 = vadd.f32 %v119, %v120
    %v122 = vadd.f32 %v114, %v121
    %123 = vst [vmem:[#allocation10] sm:$0x1] %v122
    %124 = vst [vmem:[#allocation7] sm:$0xff] %v94
    // Predicated region
    $region26: #{tpu_custom_call.1} parent=1 // pred_check
      _
    $region27: #{tpu_custom_call.1} parent=1 // pred_check_branch
      %126 = sbr.rel (0) target = $region29
    $region28: #{tpu_custom_call.1} parent=1 // pred_region
      %128 = vsyncadd [#allocation4], 0
      %s130 = sshll.u32 [#allocation7], 4
      %s131 = int_to_ptr.vmem [resolvable:$true] %s130
      %s132 = sshll.u32 %s3, 4
      %s133 = int_to_ptr.hbm [resolvable:$true] %s132
      %135 = dma.vmem_to_hbm [thread:$0]  %s131, 128, %s133, [#allocation4]
    $region29: #{tpu_custom_call.1} parent=1 // pred_fallthru
      _
    // Predicated region
    $region30: #{tpu_custom_call.1} parent=1 // pred_check
      _
    $region31: #{tpu_custom_call.1} parent=1 // pred_check_branch
      %137 = sbr.rel (0) target = $region33
    $region32: #{tpu_custom_call.1} parent=1 // pred_region
      %139 = vsyncadd [#allocation9], 0
      %s141 = sshll.u32 [#allocation8], 4
      %s142 = int_to_ptr.vmem [resolvable:$true] %s141
      %s143 = sshll.u32 %s4, 4
      %s144 = int_to_ptr.hbm [resolvable:$true] %s143
      %146 = dma.vmem_to_hbm [thread:$0]  %s142, 16, %s144, [#allocation9]
    $region33: #{tpu_custom_call.1} parent=1 // pred_fallthru
      _
    // Predicated region
    $region34: #{tpu_custom_call.1} parent=1 // pred_check
      _
    $region35: #{tpu_custom_call.1} parent=1 // pred_check_branch
      %148 = sbr.rel (0) target = $region37
    $region36: #{tpu_custom_call.1} parent=1 // pred_region
      %150 = vsyncadd [#allocation9], 0
      %s152 = sshll.u32 [#allocation10], 4
      %s153 = int_to_ptr.vmem [resolvable:$true] %s152
      %s154 = sshll.u32 %s5, 4
      %s155 = int_to_ptr.hbm [resolvable:$true] %s154
      %157 = dma.vmem_to_hbm [thread:$0]  %s153, 16, %s155, [#allocation9]
    $region37: #{tpu_custom_call.1} parent=1 // pred_fallthru
      _
    // Predicated region
    $region38: #{tpu_custom_call.1} parent=1 // pred_check
      _
    $region39: #{tpu_custom_call.1} parent=1 // pred_check_branch
      %159 = sbr.rel (0) target = $region41
    $region40: #{tpu_custom_call.1} parent=1 // pred_region
      %161 = dma.done [#allocation4], 128
    $region41: #{tpu_custom_call.1} parent=1 // pred_fallthru
      _
    // Predicated region
    $region42: #{tpu_custom_call.1} parent=1 // pred_check
      _
    $region43: #{tpu_custom_call.1} parent=1 // pred_check_branch
      %163 = sbr.rel (0) target = $region45
    $region44: #{tpu_custom_call.1} parent=1 // pred_region
      %165 = dma.done [#allocation9], 16
    $region45: #{tpu_custom_call.1} parent=1 // pred_fallthru
      _
    // Predicated region
    $region46: #{tpu_custom_call.1} parent=1 // pred_check
      _
    $region47: #{tpu_custom_call.1} parent=1 // pred_check_branch
      %167 = sbr.rel (0) target = $region49
    $region48: #{tpu_custom_call.1} parent=1 // pred_region
      %169 = dma.done [#allocation9], 16
    $region49: #{tpu_custom_call.1} parent=1 // pred_fallthru
      _
    %170 = vsyncpa [#allocation3], 1
    %171 = vsyncpa [#allocation6], 1
    %172 = vsyncpa [#allocation4], 1
    %173 = vsyncpa [#allocation9], 1

</llo_original>
